<compile_context>
chip_gen: v5e
topology: v5e:2x2
jax: 0.10.0
libtpu: 0.0.40
codegen_flags: <defaults>
</compile_context>

<pallas_src>
import functools

import jax
import jax.numpy as jnp
from jax.experimental import pallas as pl
from jax.experimental.pallas import tpu as pltpu

LEAKY_SLOPE = 0.01
MXU_DTYPE = jnp.bfloat16


def _leaky(v):
    return jnp.where(v >= 0, v, LEAKY_SLOPE * v)


# --------------------------------------------------------------------------------------
# Kernel
# --------------------------------------------------------------------------------------
def inception_kernel(xw_ref, w1_ref, b1_ref, w2_ref, b2_ref, out_ref, *, seq_len):
    # xw_ref : (1, 1, TL+6, Cin) bf16  -- time-tile with a 3-row halo on each side
    # w1_ref : (3, Cin, 4*cos)   bf16  -- fused stage-1 weights [s1 | s2a | s3a | s4]
    # b1_ref : (1, 4*cos)        f32
    # w2_ref : (5, 2*cos, 2*cos) bf16  -- fused stage-2 weights [br2 | br3] (block-diag)
    # b2_ref : (1, 2*cos)        f32
    # out_ref: (1, TL, 4*cos)    f32
    TL = out_ref.shape[1]
    cos = out_ref.shape[2] // 4

    xw = xw_ref[0, 0]                                  # (TL+6, Cin) bf16

    # ----- stage 1: all four first convolutions, fused, over TL+4 rows (incl. halo) ----
    acc1 = jnp.zeros((TL + 4, 4 * cos), jnp.float32)
    for k in range(3):                                  # 3 taps, wide MXU dots
        acc1 = acc1 + jnp.dot(xw[k:k + TL + 4], w1_ref[k],
                              preferred_element_type=jnp.float32)
    a_ext = _leaky(acc1 + b1_ref[...])                  # (TL+4, 4*cos) f32
    # channel layout: [branch1 | leaky(s2a) | leaky(s3a) | branch4]

    # ----- mask halo rows that fall outside the real sequence (stage-2 zero padding) ---
    tile_start = pl.program_id(1) * TL
    g = tile_start - 2 + jax.lax.broadcasted_iota(jnp.int32, (TL + 4, 1), 0)
    valid = jnp.logical_and(g >= 0, g < seq_len)        # (TL+4, 1)
    u = jnp.where(valid, a_ext[:, cos:3 * cos], 0.0).astype(w2_ref.dtype)  # (TL+4, 2cos)

    # ----- stage 2: branch2 (k=3) + branch3 (k=5) second convolutions, fused ----------
    acc2 = jnp.zeros((TL, 2 * cos), jnp.float32)
    for k in range(5):
        acc2 = acc2 + jnp.dot(u[k:k + TL], w2_ref[k],
                              preferred_element_type=jnp.float32)
    b23 = _leaky(acc2 + b2_ref[...])                    # (TL, 2*cos) = [br2 | br3]

    # ----- assemble (TL, 4*cos) in registers, single lane-dense store -----------------
    a_c = a_ext[2:2 + TL]                               # center rows of stage-1 output
    result = jnp.concatenate([a_c[:, 0:cos], b23, a_c[:, 3 * cos:4 * cos]], axis=-1)
    out_ref[0] = result.astype(out_ref.dtype)


# --------------------------------------------------------------------------------------
# Host-side weight fusion
# --------------------------------------------------------------------------------------
def _pack_weights(p, dtype=MXU_DTYPE):
    cin = p['w1'].shape[1]
    cos = p['w1'].shape[2]

    # Stage-1 fused weight: 3 taps, output channels [s1 | s2a | s3a | s4].
    W1 = jnp.zeros((3, cin, 4 * cos), jnp.float32)
    W1 = W1.at[1, :, 0:cos].set(p['w1'][0])             # k=1 conv -> center tap only
    W1 = W1.at[1, :, cos:2 * cos].set(p['w2a'][0])      # k=1 conv -> center tap only
    W1 = W1.at[:, :, 2 * cos:3 * cos].set(p['w3a'])     # k=3 conv
    W1 = W1.at[:, :, 3 * cos:4 * cos].set(p['w4'])      # k=3 conv
    B1 = jnp.concatenate([p['b1'], p['b2a'], p['b3a'], p['b4']], axis=1)

    # Stage-2 fused weight: 5 taps, block-diagonal over [br2 | br3] channels.
    W2 = jnp.zeros((5, 2 * cos, 2 * cos), jnp.float32)
    W2 = W2.at[1:4, 0:cos, 0:cos].set(p['w2b'])         # k=3 conv sits in taps 1..3
    W2 = W2.at[:, cos:2 * cos, cos:2 * cos].set(p['w3b'])  # k=5 conv uses all 5 taps
    B2 = jnp.concatenate([p['b2b'], p['b3b']], axis=1)

    return W1.astype(dtype), B1, W2.astype(dtype), B2


def _choose_tl(L, max_tl=512):
    """Largest time-tile that keeps VMEM bounded; multiple of 8 unless it equals L."""
    if L <= max_tl:
        return L
    for tl in range(max_tl - (max_tl % 8), 7, -8):
        if L % tl == 0:
            return tl
    return L


# --------------------------------------------------------------------------------------
# Wrapper
# --------------------------------------------------------------------------------------
def inception_forward(x, p, *, tl=None):
    """x: (N, Cin, L) float32 (PyTorch NCL). Returns (N, 4*cos, L) float32."""
    N, Cin, L = x.shape
    cos = p['w1'].shape[2]
    Co = 4 * cos

    TL = _choose_tl(L) if tl is None else tl
    assert L % TL == 0
    nt = L // TL

    W1, B1, W2, B2 = _pack_weights(p)

    # NCL -> NLC, bf16 for the MXU, pad time by 3 (stage-1 halo 1 + stage-2 halo 2).
    x_nlc = jnp.transpose(x, (0, 2, 1)).astype(MXU_DTYPE)      # (N, L, Cin)
    x_pad = jnp.pad(x_nlc, ((0, 0), (3, 3), (0, 0)))           # (N, L+6, Cin)
    # Overlapping windows so every tile carries its own halo (nt is static).
    xw = jnp.stack([x_pad[:, t * TL: t * TL + TL + 6] for t in range(nt)], axis=1)
    # xw: (N, nt, TL+6, Cin)

    kernel = functools.partial(inception_kernel, seq_len=L)

    def full_spec(a):
        return pl.BlockSpec(a.shape, lambda n, t, _nd=a.ndim: (0,) * _nd)

    # Explicit VMEM budget with headroom (v7x has only 64 MiB / 32 MiB scoped default).
    in_block_bytes = (TL + 6) * Cin * 2
    out_block_bytes = TL * Co * 4
    weight_bytes = (W1.size + W2.size) * 2 + (B1.size + B2.size) * 4
    vmem_est = 2 * (in_block_bytes + out_block_bytes) + weight_bytes
    vmem_limit = int(min(max(8 * vmem_est, 4 << 20), 48 << 20))

    out_nlc = pl.pallas_call(
        kernel,
        out_shape=jax.ShapeDtypeStruct((N, L, Co), jnp.float32),
        grid=(N, nt),
        in_specs=[pl.BlockSpec((1, 1, TL + 6, Cin), lambda n, t: (n, t, 0, 0)),
                  full_spec(W1), full_spec(B1), full_spec(W2), full_spec(B2)],
        out_specs=pl.BlockSpec((1, TL, Co), lambda n, t: (n, t, 0)),
        compiler_params=pltpu.CompilerParams(
            dimension_semantics=("parallel", "parallel"),
            vmem_limit_bytes=vmem_limit),
    )(xw, W1, B1, W2, B2)

    return jnp.transpose(out_nlc, (0, 2, 1))                   # back to (N, Co, L)


# --------------------------------------------------------------------------------------
# Parameter construction (deterministic)
# --------------------------------------------------------------------------------------
def make_params(key, cin, co):
    assert co % 4 == 0
    cos = co // 4

    def xavier(key, k, c_in, c_out):
        # torch conv weight (c_out, c_in, k); stored here as (k, c_in, c_out)
        fan_in, fan_out = c_in * k, c_out * k
        std = (2.0 / (fan_in + fan_out)) ** 0.5
        return std * jax.random.normal(key, (k, c_in, c_out), jnp.float32)

    ks = jax.random.split(key, 12)
    return {
        'w1':  xavier(ks[0], 1, cin, cos),
        'b1':  0.1 * jax.random.normal(ks[1], (1, cos), jnp.float32),
        'w2a': xavier(ks[2], 1, cin, cos),
        'b2a': jnp.zeros((1, cos), jnp.float32),     # init.constant_(bias, 0)
        'w2b': xavier(ks[3], 3, cos, cos),
        'b2b': 0.1 * jax.random.normal(ks[4], (1, cos), jnp.float32),
        'w3a': xavier(ks[5], 3, cin, cos),
        'b3a': jnp.zeros((1, cos), jnp.float32),     # init.constant_(bias, 0)
        'w3b': xavier(ks[6], 5, cos, cos),
        'b3b': 0.1 * jax.random.normal(ks[7], (1, cos), jnp.float32),
        'w4':  xavier(ks[8], 3, cin, cos),
        'b4':  0.1 * jax.random.normal(ks[9], (1, cos), jnp.float32),
    }


# --------------------------------------------------------------------------------------
# Pure-JAX reference (lax.conv), mimicking the kernel's bf16 MXU inputs / f32 accumulation
# --------------------------------------------------------------------------------------
def _bf16(a):
    return a.astype(jnp.bfloat16).astype(jnp.float32)


def _conv1d_ref(x, w_kic, b, pad):
    # x: (N, Cin, L);  w_kic: (K, Cin, Cout);  b: (1, Cout)
    w_oik = jnp.transpose(_bf16(w_kic), (2, 1, 0))   # (Cout, Cin, K)
    y = jax.lax.conv_general_dilated(
        _bf16(x), w_oik, (1,), [(pad, pad)],
        dimension_numbers=('NCH', 'OIH', 'NCH'),
        precision=jax.lax.Precision.HIGHEST)
    return y + b.reshape(1, -1, 1)


def inception_ref(x, p):
    b1 = _conv1d_ref(x, p['w1'], p['b1'], 0)
    b2 = _conv1d_ref(_leaky(_conv1d_ref(x, p['w2a'], p['b2a'], 0)),
                     p['w2b'], p['b2b'], 1)
    b3 = _conv1d_ref(_leaky(_conv1d_ref(x, p['w3a'], p['b3a'], 1)),
                     p['w3b'], p['b3b'], 2)
    b4 = _conv1d_ref(x, p['w4'], p['b4'], 1)
    return _leaky(jnp.concatenate([b1, b2, b3, b4], axis=1))


if __name__ == "__main__":
    N, CIN, L, CO = 2, 8, 16, 16    # small shapes: batch=2, cin=8, seq_len=16, co=16
    key = jax.random.PRNGKey(0)
    k_x, k_p = jax.random.split(key)

    x = jax.random.normal(k_x, (N, CIN, L), jnp.float32)   # PyTorch NCL input
    params = make_params(k_p, CIN, CO)

    out = jax.jit(inception_forward)(x, params)
    out = jax.block_until_ready(out)

    ref = inception_ref(x, params)
    assert out.shape == (N, CO, L), out.shape
    max_err = jnp.max(jnp.abs(out - ref))
    assert jnp.allclose(out, ref, atol=2e-3, rtol=2e-3), f"max err {max_err}"

    print("KERNEL_OK")
</pallas_src>

<mosaic_0001>
module attributes {stable_mosaic.version = 11 : i64} {
  func.func @inception_kernel(%arg0: i32, %arg1: i32, %arg2: memref<1x1x22x8xbf16, #tpu.memory_space<vmem>>, %arg3: memref<3x8x16xbf16, #tpu.memory_space<vmem>>, %arg4: memref<1x16xf32, #tpu.memory_space<vmem>>, %arg5: memref<5x8x8xbf16, #tpu.memory_space<vmem>>, %arg6: memref<1x8xf32, #tpu.memory_space<vmem>>, %arg7: memref<1x16x16xf32, #tpu.memory_space<vmem>>) attributes {dimension_semantics = [#tpu.dimension_semantics<parallel>, #tpu.dimension_semantics<parallel>], iteration_bounds = array<i64: 2, 1>, scalar_prefetch = 0 : i64, scratch_operands = 0 : i64, tpu.core_type = #tpu.core_type<tc>, window_params = [{transform_indices = @transform_0, window_bounds = array<i64: 1, 1, 22, 8>}, {pipeline_mode = #tpu.pipeline_mode<synchronous>, transform_indices = @transform_1, window_bounds = array<i64: 3, 8, 16>}, {pipeline_mode = #tpu.pipeline_mode<synchronous>, transform_indices = @transform_2, window_bounds = array<i64: 1, 16>}, {pipeline_mode = #tpu.pipeline_mode<synchronous>, transform_indices = @transform_3, window_bounds = array<i64: 5, 8, 8>}, {pipeline_mode = #tpu.pipeline_mode<synchronous>, transform_indices = @transform_4, window_bounds = array<i64: 1, 8>}, {transform_indices = @transform_5, window_bounds = array<i64: 1, 16, 16>}]} {
    %c0 = arith.constant 0 : index
    %c0_0 = arith.constant 0 : index
    %c0_1 = arith.constant 0 : index
    %c0_2 = arith.constant 0 : index
    %0 = vector.load %arg2[%c0, %c0_0, %c0_1, %c0_2] : memref<1x1x22x8xbf16, #tpu.memory_space<vmem>>, vector<1x1x22x8xbf16>
    %1 = vector.shape_cast %0 : vector<1x1x22x8xbf16> to vector<22x8xbf16>
    %cst = arith.constant 0.000000e+00 : f32
    %2 = vector.broadcast %cst : f32 to vector<20x16xf32>
    %3 = vector.extract_strided_slice %1 {offsets = [0, 0], sizes = [20, 8], strides = [1, 1]} : vector<22x8xbf16> to vector<20x8xbf16>
    %c0_3 = arith.constant 0 : index
    %c0_4 = arith.constant 0 : index
    %c0_5 = arith.constant 0 : index
    %4 = vector.load %arg3[%c0_3, %c0_4, %c0_5] : memref<3x8x16xbf16, #tpu.memory_space<vmem>>, vector<1x8x16xbf16>
    %5 = vector.shape_cast %4 : vector<1x8x16xbf16> to vector<8x16xbf16>
    %cst_6 = arith.constant dense<0.000000e+00> : vector<20x16xf32>
    %6 = tpu.matmul %3, %5, %cst_6 {dimension_numbers = #tpu.dot_dimension_numbers<[1], [0], [0], [1], [0, 0, 1, 1], [], []>} : vector<20x8xbf16>, vector<8x16xbf16>, vector<20x16xf32> -> vector<20x16xf32>
    %7 = arith.addf %2, %6 : vector<20x16xf32>
    %8 = vector.extract_strided_slice %1 {offsets = [1, 0], sizes = [20, 8], strides = [1, 1]} : vector<22x8xbf16> to vector<20x8xbf16>
    %c1 = arith.constant 1 : index
    %c0_7 = arith.constant 0 : index
    %c0_8 = arith.constant 0 : index
    %9 = vector.load %arg3[%c1, %c0_7, %c0_8] : memref<3x8x16xbf16, #tpu.memory_space<vmem>>, vector<1x8x16xbf16>
    %10 = vector.shape_cast %9 : vector<1x8x16xbf16> to vector<8x16xbf16>
    %cst_9 = arith.constant dense<0.000000e+00> : vector<20x16xf32>
    %11 = tpu.matmul %8, %10, %cst_9 {dimension_numbers = #tpu.dot_dimension_numbers<[1], [0], [0], [1], [0, 0, 1, 1], [], []>} : vector<20x8xbf16>, vector<8x16xbf16>, vector<20x16xf32> -> vector<20x16xf32>
    %12 = arith.addf %7, %11 : vector<20x16xf32>
    %13 = vector.extract_strided_slice %1 {offsets = [2, 0], sizes = [20, 8], strides = [1, 1]} : vector<22x8xbf16> to vector<20x8xbf16>
    %c2 = arith.constant 2 : index
    %c0_10 = arith.constant 0 : index
    %c0_11 = arith.constant 0 : index
    %14 = vector.load %arg3[%c2, %c0_10, %c0_11] : memref<3x8x16xbf16, #tpu.memory_space<vmem>>, vector<1x8x16xbf16>
    %15 = vector.shape_cast %14 : vector<1x8x16xbf16> to vector<8x16xbf16>
    %cst_12 = arith.constant dense<0.000000e+00> : vector<20x16xf32>
    %16 = tpu.matmul %13, %15, %cst_12 {dimension_numbers = #tpu.dot_dimension_numbers<[1], [0], [0], [1], [0, 0, 1, 1], [], []>} : vector<20x8xbf16>, vector<8x16xbf16>, vector<20x16xf32> -> vector<20x16xf32>
    %17 = arith.addf %12, %16 : vector<20x16xf32>
    %c0_13 = arith.constant 0 : index
    %c0_14 = arith.constant 0 : index
    %18 = vector.load %arg4[%c0_13, %c0_14] : memref<1x16xf32, #tpu.memory_space<vmem>>, vector<1x16xf32>
    %19 = vector.broadcast %18 : vector<1x16xf32> to vector<20x16xf32>
    %20 = arith.addf %17, %19 : vector<20x16xf32>
    %cst_15 = arith.constant 0.000000e+00 : f32
    %21 = vector.broadcast %cst_15 : f32 to vector<20x16xf32>
    %22 = arith.cmpf oge, %20, %21 : vector<20x16xf32>
    %cst_16 = arith.constant 0.00999999977 : f32
    %23 = vector.broadcast %cst_16 : f32 to vector<20x16xf32>
    %24 = arith.mulf %23, %20 : vector<20x16xf32>
    %25 = arith.select %22, %20, %24 : vector<20x16xi1>, vector<20x16xf32>
    %c16_i32 = arith.constant 16 : i32
    %26 = arith.muli %arg1, %c16_i32 : i32
    %c2_i32 = arith.constant 2 : i32
    %27 = arith.subi %26, %c2_i32 : i32
    %28 = tpu.iota {dimensions = array<i32: 0>} : vector<20x1xi32>
    %29 = vector.broadcast %27 : i32 to vector<20x1xi32>
    %30 = arith.addi %29, %28 : vector<20x1xi32>
    %c0_i32 = arith.constant 0 : i32
    %31 = vector.broadcast %c0_i32 : i32 to vector<20x1xi32>
    %32 = arith.cmpi sge, %30, %31 : vector<20x1xi32>
    %c16_i32_17 = arith.constant 16 : i32
    %33 = vector.broadcast %c16_i32_17 : i32 to vector<20x1xi32>
    %34 = arith.cmpi slt, %30, %33 : vector<20x1xi32>
    %35 = arith.andi %32, %34 : vector<20x1xi1>
    %36 = vector.extract_strided_slice %25 {offsets = [0, 4], sizes = [20, 8], strides = [1, 1]} : vector<20x16xf32> to vector<20x8xf32>
    %cst_18 = arith.constant 0.000000e+00 : f32
    %37 = vector.shape_cast %35 : vector<20x1xi1> to vector<20x1xi1>
    %38 = vector.broadcast %37 : vector<20x1xi1> to vector<20x8xi1>
    %39 = vector.broadcast %cst_18 : f32 to vector<20x8xf32>
    %40 = arith.select %38, %36, %39 : vector<20x8xi1>, vector<20x8xf32>
    %41 = arith.truncf %40 : vector<20x8xf32> to vector<20x8xbf16>
    %cst_19 = arith.constant 0.000000e+00 : f32
    %42 = vector.broadcast %cst_19 : f32 to vector<16x8xf32>
    %43 = vector.extract_strided_slice %41 {offsets = [0, 0], sizes = [16, 8], strides = [1, 1]} : vector<20x8xbf16> to vector<16x8xbf16>
    %c0_20 = arith.constant 0 : index
    %c0_21 = arith.constant 0 : index
    %c0_22 = arith.constant 0 : index
    %44 = vector.load %arg5[%c0_20, %c0_21, %c0_22] : memref<5x8x8xbf16, #tpu.memory_space<vmem>>, vector<1x8x8xbf16>
    %45 = vector.shape_cast %44 : vector<1x8x8xbf16> to vector<8x8xbf16>
    %cst_23 = arith.constant dense<0.000000e+00> : vector<16x8xf32>
    %46 = tpu.matmul %43, %45, %cst_23 {dimension_numbers = #tpu.dot_dimension_numbers<[1], [0], [0], [1], [0, 0, 1, 1], [], []>} : vector<16x8xbf16>, vector<8x8xbf16>, vector<16x8xf32> -> vector<16x8xf32>
    %47 = arith.addf %42, %46 : vector<16x8xf32>
    %48 = vector.extract_strided_slice %41 {offsets = [1, 0], sizes = [16, 8], strides = [1, 1]} : vector<20x8xbf16> to vector<16x8xbf16>
    %c1_24 = arith.constant 1 : index
    %c0_25 = arith.constant 0 : index
    %c0_26 = arith.constant 0 : index
    %49 = vector.load %arg5[%c1_24, %c0_25, %c0_26] : memref<5x8x8xbf16, #tpu.memory_space<vmem>>, vector<1x8x8xbf16>
    %50 = vector.shape_cast %49 : vector<1x8x8xbf16> to vector<8x8xbf16>
    %cst_27 = arith.constant dense<0.000000e+00> : vector<16x8xf32>
    %51 = tpu.matmul %48, %50, %cst_27 {dimension_numbers = #tpu.dot_dimension_numbers<[1], [0], [0], [1], [0, 0, 1, 1], [], []>} : vector<16x8xbf16>, vector<8x8xbf16>, vector<16x8xf32> -> vector<16x8xf32>
    %52 = arith.addf %47, %51 : vector<16x8xf32>
    %53 = vector.extract_strided_slice %41 {offsets = [2, 0], sizes = [16, 8], strides = [1, 1]} : vector<20x8xbf16> to vector<16x8xbf16>
    %c2_28 = arith.constant 2 : index
    %c0_29 = arith.constant 0 : index
    %c0_30 = arith.constant 0 : index
    %54 = vector.load %arg5[%c2_28, %c0_29, %c0_30] : memref<5x8x8xbf16, #tpu.memory_space<vmem>>, vector<1x8x8xbf16>
    %55 = vector.shape_cast %54 : vector<1x8x8xbf16> to vector<8x8xbf16>
    %cst_31 = arith.constant dense<0.000000e+00> : vector<16x8xf32>
    %56 = tpu.matmul %53, %55, %cst_31 {dimension_numbers = #tpu.dot_dimension_numbers<[1], [0], [0], [1], [0, 0, 1, 1], [], []>} : vector<16x8xbf16>, vector<8x8xbf16>, vector<16x8xf32> -> vector<16x8xf32>
    %57 = arith.addf %52, %56 : vector<16x8xf32>
    %58 = vector.extract_strided_slice %41 {offsets = [3, 0], sizes = [16, 8], strides = [1, 1]} : vector<20x8xbf16> to vector<16x8xbf16>
    %c3 = arith.constant 3 : index
    %c0_32 = arith.constant 0 : index
    %c0_33 = arith.constant 0 : index
    %59 = vector.load %arg5[%c3, %c0_32, %c0_33] : memref<5x8x8xbf16, #tpu.memory_space<vmem>>, vector<1x8x8xbf16>
    %60 = vector.shape_cast %59 : vector<1x8x8xbf16> to vector<8x8xbf16>
    %cst_34 = arith.constant dense<0.000000e+00> : vector<16x8xf32>
    %61 = tpu.matmul %58, %60, %cst_34 {dimension_numbers = #tpu.dot_dimension_numbers<[1], [0], [0], [1], [0, 0, 1, 1], [], []>} : vector<16x8xbf16>, vector<8x8xbf16>, vector<16x8xf32> -> vector<16x8xf32>
    %62 = arith.addf %57, %61 : vector<16x8xf32>
    %63 = vector.extract_strided_slice %41 {offsets = [4, 0], sizes = [16, 8], strides = [1, 1]} : vector<20x8xbf16> to vector<16x8xbf16>
    %c4 = arith.constant 4 : index
    %c0_35 = arith.constant 0 : index
    %c0_36 = arith.constant 0 : index
    %64 = vector.load %arg5[%c4, %c0_35, %c0_36] : memref<5x8x8xbf16, #tpu.memory_space<vmem>>, vector<1x8x8xbf16>
    %65 = vector.shape_cast %64 : vector<1x8x8xbf16> to vector<8x8xbf16>
    %cst_37 = arith.constant dense<0.000000e+00> : vector<16x8xf32>
    %66 = tpu.matmul %63, %65, %cst_37 {dimension_numbers = #tpu.dot_dimension_numbers<[1], [0], [0], [1], [0, 0, 1, 1], [], []>} : vector<16x8xbf16>, vector<8x8xbf16>, vector<16x8xf32> -> vector<16x8xf32>
    %67 = arith.addf %62, %66 : vector<16x8xf32>
    %c0_38 = arith.constant 0 : index
    %c0_39 = arith.constant 0 : index
    %68 = vector.load %arg6[%c0_38, %c0_39] : memref<1x8xf32, #tpu.memory_space<vmem>>, vector<1x8xf32>
    %69 = vector.broadcast %68 : vector<1x8xf32> to vector<16x8xf32>
    %70 = arith.addf %67, %69 : vector<16x8xf32>
    %cst_40 = arith.constant 0.000000e+00 : f32
    %71 = vector.broadcast %cst_40 : f32 to vector<16x8xf32>
    %72 = arith.cmpf oge, %70, %71 : vector<16x8xf32>
    %cst_41 = arith.constant 0.00999999977 : f32
    %73 = vector.broadcast %cst_41 : f32 to vector<16x8xf32>
    %74 = arith.mulf %73, %70 : vector<16x8xf32>
    %75 = arith.select %72, %70, %74 : vector<16x8xi1>, vector<16x8xf32>
    %76 = vector.extract_strided_slice %25 {offsets = [2, 0], sizes = [16, 16], strides = [1, 1]} : vector<20x16xf32> to vector<16x16xf32>
    %77 = vector.extract_strided_slice %76 {offsets = [0, 0], sizes = [16, 4], strides = [1, 1]} : vector<16x16xf32> to vector<16x4xf32>
    %78 = vector.extract_strided_slice %76 {offsets = [0, 12], sizes = [16, 4], strides = [1, 1]} : vector<16x16xf32> to vector<16x4xf32>
    %79 = tpu.concatenate %77, %75, %78 in 1 : vector<16x4xf32>, vector<16x8xf32>, vector<16x4xf32> -> vector<16x16xf32>
    %c0_42 = arith.constant 0 : index
    %c0_43 = arith.constant 0 : index
    %c0_44 = arith.constant 0 : index
    %80 = vector.load %arg7[%c0_42, %c0_43, %c0_44] : memref<1x16x16xf32, #tpu.memory_space<vmem>>, vector<1x16x16xf32>
    %81 = vector.shape_cast %80 : vector<1x16x16xf32> to vector<16x16xf32>
    %82 = vector.shape_cast %79 : vector<16x16xf32> to vector<1x16x16xf32>
    tpu.vector_store %arg7[%c0_42, %c0_43, %c0_44], %82 {strides = array<i32>} : memref<1x16x16xf32, #tpu.memory_space<vmem>>, vector<1x16x16xf32>,
    return
  }
  func.func @transform_0(%arg0: i32, %arg1: i32) -> (i32, i32, i32, i32) {
    %c0_i32 = arith.constant 0 : i32
    %c0_i32_0 = arith.constant 0 : i32
    %c0_i32_1 = arith.constant 0 : i32
    return %arg0, %arg1, %c0_i32, %c0_i32_0 : i32, i32, i32, i32
  }
  func.func @transform_1(%arg0: i32, %arg1: i32) -> (i32, i32, i32) {
    %c0_i32 = arith.constant 0 : i32
    %c0_i32_0 = arith.constant 0 : i32
    %c0_i32_1 = arith.constant 0 : i32
    %c0_i32_2 = arith.constant 0 : i32
    return %c0_i32, %c0_i32_0, %c0_i32_1 : i32, i32, i32
  }
  func.func @transform_2(%arg0: i32, %arg1: i32) -> (i32, i32) {
    %c0_i32 = arith.constant 0 : i32
    %c0_i32_0 = arith.constant 0 : i32
    %c0_i32_1 = arith.constant 0 : i32
    return %c0_i32, %c0_i32_0 : i32, i32
  }
  func.func @transform_3(%arg0: i32, %arg1: i32) -> (i32, i32, i32) {
    %c0_i32 = arith.constant 0 : i32
    %c0_i32_0 = arith.constant 0 : i32
    %c0_i32_1 = arith.constant 0 : i32
    %c0_i32_2 = arith.constant 0 : i32
    return %c0_i32, %c0_i32_0, %c0_i32_1 : i32, i32, i32
  }
  func.func @transform_4(%arg0: i32, %arg1: i32) -> (i32, i32) {
    %c0_i32 = arith.constant 0 : i32
    %c0_i32_0 = arith.constant 0 : i32
    %c0_i32_1 = arith.constant 0 : i32
    return %c0_i32, %c0_i32_0 : i32, i32
  }
  func.func @transform_5(%arg0: i32, %arg1: i32) -> (i32, i32, i32) {
    %c0_i32 = arith.constant 0 : i32
    %c0_i32_0 = arith.constant 0 : i32
    return %arg0, %arg1, %c0_i32 : i32, i32, i32
  }
}

</mosaic_0001>

<llo_original>
// kernel: inception_forward.1
$region0: #{inception_forward.1}
  #allocation0 [shape = 'u32[]', space=smem, size = 0x4, offset = 0x4, fixed_abs, tag = 'smem constant byte address 0x4 - core index']
  #allocation1 [shape = 'u32[72,128]{1,0:T(1,128)}', space=vmem, size = 0x9000, scoped, tag = 'internal scratch']
  %s0 = inlined_call_operand.vmem [shape: bf16[2,1,22,8], index: 0, kind: input, shape index: {}]
  %s1 = inlined_call_operand.vmem [shape: bf16[3,8,16], index: 1, kind: input, shape index: {}]
  %s2 = inlined_call_operand.vmem [shape: f32[1,16], index: 2, kind: input, shape index: {}]
  %s3 = inlined_call_operand.vmem [shape: bf16[5,8,8], index: 3, kind: input, shape index: {}]
  %s4 = inlined_call_operand.vmem [shape: f32[1,8], index: 4, kind: input, shape index: {}]
  %s5 = inlined_call_operand.vmem [shape: f32[2,16,16], index: 5, kind: output, shape index: {}]
  %s6 = sld [smem:[#allocation0]]
  $region53: #{inception_forward.1} parent=0
    _
  %s8 = ssub.s32 1, %s6
  %s9 = scalar_select 0, %s8, %s6
  loop: start=0, step=1, limit=4
  $region2: #{inception_forward.1} parent=0 // loop_pre_header
    _
  $region3: #{inception_forward.1} parent=0 // loop_header
    %s11 = sphi 0, %s15
    %p12 = scmp.ge.s32.totalorder %s11, 4
    %s18 = sphi 0, %s30
    %s19 = sphi 0, %s26
    %s20 = sphi 0, %s18
    %s21 = sphi 0, %s19
    %s22 = sphi 0, %s20
    %s23 = sphi 0, %s21
    %s35 = sphi 0, %s37
    %s38 = sphi 0, %s35
    %s39 = sphi 0, %s38
    %s55 = sphi 0, %s39
    %s59 = sphi 0, %s59
    %s61 = sphi 0, %s59
    %s62 = sphi 0, %s61
    %s76 = sphi 0, %s62
    %s80 = sphi 0, %s80
    %s82 = sphi 0, %s80
    %s83 = sphi 0, %s82
    %s97 = sphi 0, %s83
    %s101 = sphi 0, %s101
    %s103 = sphi 0, %s101
    %s104 = sphi 0, %s103
    %s118 = sphi 0, %s104
    %s122 = sphi 0, %s122
    %s124 = sphi 0, %s122
    %s125 = sphi 0, %s124
    %s139 = sphi 0, %s125
    %s147 = sphi 0, %s149
    %s150 = sphi 0, %s147
    %s151 = sphi 0, %s150
    %s167 = sphi 0, %s151
  $region4: #{inception_forward.1} parent=0 // loop_header_branch
    %14 = sbr.rel (%p12) target = $region8
  $region5: #{inception_forward.1} parent=0 // loop_body
    %s16 = ssub.s32 %s11, 1
    %s17 = ssub.s32 %s11, 2
    %s24 = sadd.s32 1, %s19
    %p25 = scmp.ge.s32.totalorder %s24, 1
    %s26 = scalar_select %p25, 0, %s24
    %s27 = sadd.s32 1, %s18
    %s28 = scalar_select %p25, %s27, %s18
    %p29 = scmp.ge.s32.totalorder %s28, 2
    %s30 = scalar_select %p29, 0, %s28
    %s31 = ssub.s32 %s18, %s30
    %s32 = ssub.s32 %s19, %s26
    %s33 = sor.u32 %s31, %s32
    %p34 = scmp.eq.s32.totalorder %s33, 0
    %s36 = sadd.s32 %s35, 1
    %s37 = scalar_select %p34, %s35, %s36
    %p40 = pneg %p34
    %p41 = scmp.eq.s32.totalorder %s11, 1
    %p42 = por %p40, %p41
    %p43 = scmp.ne.s32.totalorder %s35, %s38
    %p44 = scmp.eq.s32.totalorder %s11, 0
    %p45 = por %p43, %p44
    %p46 = scmp.ne.s32.totalorder %s35, %s38
    %p47 = scmp.eq.s32.totalorder %s16, 1
    %p48 = por %p46, %p47
    %p49 = scmp.ne.s32.totalorder %s38, %s39
    %p50 = scmp.eq.s32.totalorder %s16, 0
    %p51 = por %p49, %p50
    %p52 = scmp.ne.s32.totalorder %s38, %s39
    %p53 = scmp.eq.s32.totalorder %s17, 1
    %p54 = por %p52, %p53
    %p56 = scmp.ne.s32.totalorder %s39, %s55
    %p57 = scmp.eq.s32.totalorder %s17, 0
    %p58 = por %p56, %p57
    %s60 = sadd.s32 %s59, 1
    %p63 = scmp.eq.s32.totalorder %s11, 1
    %p64 = scmp.ne.s32.totalorder %s59, %s61
    %p65 = scmp.eq.s32.totalorder %s11, 0
    %p66 = por %p64, %p65
    %p67 = scmp.ne.s32.totalorder %s59, %s61
    %p68 = scmp.eq.s32.totalorder %s16, 1
    %p69 = por %p67, %p68
    %p70 = scmp.ne.s32.totalorder %s61, %s62
    %p71 = scmp.eq.s32.totalorder %s16, 0
    %p72 = por %p70, %p71
    %p73 = scmp.ne.s32.totalorder %s61, %s62
    %p74 = scmp.eq.s32.totalorder %s17, 1
    %p75 = por %p73, %p74
    %p77 = scmp.ne.s32.totalorder %s62, %s76
    %p78 = scmp.eq.s32.totalorder %s17, 0
    %p79 = por %p77, %p78
    %s81 = sadd.s32 %s80, 1
    %p84 = scmp.eq.s32.totalorder %s11, 1
    %p85 = scmp.ne.s32.totalorder %s80, %s82
    %p86 = scmp.eq.s32.totalorder %s11, 0
    %p87 = por %p85, %p86
    %p88 = scmp.ne.s32.totalorder %s80, %s82
    %p89 = scmp.eq.s32.totalorder %s16, 1
    %p90 = por %p88, %p89
    %p91 = scmp.ne.s32.totalorder %s82, %s83
    %p92 = scmp.eq.s32.totalorder %s16, 0
    %p93 = por %p91, %p92
    %p94 = scmp.ne.s32.totalorder %s82, %s83
    %p95 = scmp.eq.s32.totalorder %s17, 1
    %p96 = por %p94, %p95
    %p98 = scmp.ne.s32.totalorder %s83, %s97
    %p99 = scmp.eq.s32.totalorder %s17, 0
    %p100 = por %p98, %p99
    %s102 = sadd.s32 %s101, 1
    %p105 = scmp.eq.s32.totalorder %s11, 1
    %p106 = scmp.ne.s32.totalorder %s101, %s103
    %p107 = scmp.eq.s32.totalorder %s11, 0
    %p108 = por %p106, %p107
    %p109 = scmp.ne.s32.totalorder %s101, %s103
    %p110 = scmp.eq.s32.totalorder %s16, 1
    %p111 = por %p109, %p110
    %p112 = scmp.ne.s32.totalorder %s103, %s104
    %p113 = scmp.eq.s32.totalorder %s16, 0
    %p114 = por %p112, %p113
    %p115 = scmp.ne.s32.totalorder %s103, %s104
    %p116 = scmp.eq.s32.totalorder %s17, 1
    %p117 = por %p115, %p116
    %p119 = scmp.ne.s32.totalorder %s104, %s118
    %p120 = scmp.eq.s32.totalorder %s17, 0
    %p121 = por %p119, %p120
    %s123 = sadd.s32 %s122, 1
    %p126 = scmp.eq.s32.totalorder %s11, 1
    %p127 = scmp.ne.s32.totalorder %s122, %s124
    %p128 = scmp.eq.s32.totalorder %s11, 0
    %p129 = por %p127, %p128
    %p130 = scmp.ne.s32.totalorder %s122, %s124
    %p131 = scmp.eq.s32.totalorder %s16, 1
    %p132 = por %p130, %p131
    %p133 = scmp.ne.s32.totalorder %s124, %s125
    %p134 = scmp.eq.s32.totalorder %s16, 0
    %p135 = por %p133, %p134
    %p136 = scmp.ne.s32.totalorder %s124, %s125
    %p137 = scmp.eq.s32.totalorder %s17, 1
    %p138 = por %p136, %p137
    %p140 = scmp.ne.s32.totalorder %s125, %s139
    %p141 = scmp.eq.s32.totalorder %s17, 0
    %p142 = por %p140, %p141
    %s143 = ssub.s32 %s18, %s30
    %s144 = ssub.s32 %s19, %s26
    %s145 = sor.u32 %s143, %s144
    %p146 = scmp.eq.s32.totalorder %s145, 0
    %s148 = sadd.s32 %s147, 1
    %s149 = scalar_select %p146, %s147, %s148
    %p152 = pneg %p146
    %p153 = scmp.eq.s32.totalorder %s11, 1
    %p154 = por %p152, %p153
    %p155 = scmp.ne.s32.totalorder %s147, %s150
    %p156 = scmp.eq.s32.totalorder %s11, 0
    %p157 = por %p155, %p156
    %p158 = scmp.ne.s32.totalorder %s147, %s150
    %p159 = scmp.eq.s32.totalorder %s16, 1
    %p160 = por %p158, %p159
    %p161 = scmp.ne.s32.totalorder %s150, %s151
    %p162 = scmp.eq.s32.totalorder %s16, 0
    %p163 = por %p161, %p162
    %p164 = scmp.ne.s32.totalorder %s150, %s151
    %p165 = scmp.eq.s32.totalorder %s17, 1
    %p166 = por %p164, %p165
    %p168 = scmp.ne.s32.totalorder %s151, %s167
    %p169 = scmp.eq.s32.totalorder %s17, 0
    %p170 = por %p168, %p169
    %p171 = scmp.le.s32.totalorder 1, %s11
    %p172 = scmp.lt.s32.totalorder %s11, 3
    %p173 = pnand %p171, %p172
    %p174 = pneg %p173
    // Predicated region
    $region9: #{inception_forward.1} parent=5 // pred_check
      _
    $region10: #{inception_forward.1} parent=5 // pred_check_branch
      %176 = sbr.rel (%p173) target = $region12
    $region11: #{inception_forward.1} parent=5 // pred_region
      %s177 = ssub.s32 %s11, 1
      // Predicated region
      $region13: #{inception_forward.1} parent=11 // pred_check
        %p178 = pneg %p72
      $region14: #{inception_forward.1} parent=11 // pred_check_branch
        %180 = sbr.rel (%p178) target = $region16
      $region15: #{inception_forward.1} parent=11 // pred_region
        _
      $region16: #{inception_forward.1} parent=11 // pred_fallthru
        _
      // Predicated region
      $region17: #{inception_forward.1} parent=11 // pred_check
        %p181 = pneg %p93
      $region18: #{inception_forward.1} parent=11 // pred_check_branch
        %183 = sbr.rel (%p181) target = $region20
      $region19: #{inception_forward.1} parent=11 // pred_region
        _
      $region20: #{inception_forward.1} parent=11 // pred_fallthru
        _
      // Predicated region
      $region21: #{inception_forward.1} parent=11 // pred_check
        %p184 = pneg %p114
      $region22: #{inception_forward.1} parent=11 // pred_check_branch
        %186 = sbr.rel (%p184) target = $region24
      $region23: #{inception_forward.1} parent=11 // pred_region
        _
      $region24: #{inception_forward.1} parent=11 // pred_fallthru
        _
      // Predicated region
      $region25: #{inception_forward.1} parent=11 // pred_check
        %p187 = pneg %p135
      $region26: #{inception_forward.1} parent=11 // pred_check_branch
        %189 = sbr.rel (%p187) target = $region28
      $region27: #{inception_forward.1} parent=11 // pred_region
        _
      $region28: #{inception_forward.1} parent=11 // pred_fallthru
        _
    $region12: #{inception_forward.1} parent=5 // pred_fallthru
      _
    %p190 = scmp.lt.s32.totalorder %s11, 2
    // Predicated region
    $region29: #{inception_forward.1} parent=5 // pred_check
      %p191 = pneg %p190
    $region30: #{inception_forward.1} parent=5 // pred_check_branch
      %193 = sbr.rel (%p191) target = $region32
    $region31: #{inception_forward.1} parent=5 // pred_region
      // Predicated region
      $region33: #{inception_forward.1} parent=31 // pred_check
        %p194 = pneg %p45
      $region34: #{inception_forward.1} parent=31 // pred_check_branch
        %196 = sbr.rel (%p194) target = $region36
      $region35: #{inception_forward.1} parent=31 // pred_region
        %p197 = scmp.lt.s32.totalorder %s18, 1
        %s198 = scalar_select %p197, %s18, 1
        %p199 = scmp.lt.s32.totalorder %s19, 0
        %s200 = scalar_select %p199, %s19, 0
        %s201 = smul.addr %s200, 3
        %s202 = smul.addr %s198, 3
        %s203 = sadd.s32 %s201, %s202
        %s204 = smul.addr %s203, 4
        %s205 = scalar_lea.vmem %s0, %s204
      $region36: #{inception_forward.1} parent=31 // pred_fallthru
        _
    $region32: #{inception_forward.1} parent=5 // pred_fallthru
      _
    %p206 = scmp.le.s32.totalorder 1, %s11
    %p207 = scmp.lt.s32.totalorder %s11, 3
    %p208 = pnand %p206, %p207
    %p209 = pneg %p208
    // Predicated region
    $region37: #{inception_forward.1} parent=5 // pred_check
      _
    $region38: #{inception_forward.1} parent=5 // pred_check_branch
      %211 = sbr.rel (%p208) target = $region40
    $region39: #{inception_forward.1} parent=5 // pred_region
      %s212 = ssub.s32 %s11, 1
      %p213 = scmp.lt.s32.totalorder %s20, 1
      %s214 = scalar_select %p213, %s20, 1
      %p215 = scmp.lt.s32.totalorder %s21, 0
      %s216 = scalar_select %p215, %s21, 0
      %s217 = smul.addr %s216, 3
      %s218 = smul.addr %s214, 3
      %s219 = sadd.s32 %s217, %s218
      %s220 = smul.addr %s219, 4
      %s221 = scalar_lea.vmem %s0, %s220
      %p222 = pneg %p51
      %p223 = pneg %p48
      %p224 = pneg %p72
      %p225 = pneg %p69
      %p226 = pneg %p93
      %p227 = pneg %p90
      %p228 = pneg %p114
      %p229 = pneg %p111
      %p230 = pneg %p135
      %p231 = pneg %p132
      %p232 = pneg %p163
      %p233 = pneg %p160
      %s234 = smul.u32 2, %s21
      %p235 = scmp.lt.s32.totalorder %s20, 1
      %s236 = scalar_select %p235, %s20, 1
      %p237 = scmp.lt.s32.totalorder %s234, 1
      %s238 = scalar_select %p237, %s234, 1
      %s239 = smul.addr %s236, 2
      %s240 = sadd.s32 %s238, %s239
      %s241 = smul.addr %s240, 8
      %s242 = scalar_lea.vmem %s5, %s241
      %p243 = scmp.lt.s32.totalorder %s20, 1
      %s244 = scalar_select %p243, %s20, 1
      %p245 = scmp.lt.s32.totalorder %s21, 0
      %s246 = scalar_select %p245, %s21, 0
      %s247 = smul.addr %s246, 3
      %s248 = smul.addr %s244, 3
      %s249 = sadd.s32 %s247, %s248
      %s250 = smul.addr %s249, 4
      %s251 = scalar_lea.vmem %s0, %s250
      %s252 = smul.u32 2, %s21
      %p253 = scmp.lt.s32.totalorder %s20, 1
      %s254 = scalar_select %p253, %s20, 1
      %p255 = scmp.lt.s32.totalorder %s252, 1
      %s256 = scalar_select %p255, %s252, 1
      %s257 = smul.addr %s254, 2
      %s258 = sadd.s32 %s256, %s257
      %s259 = smul.addr %s258, 8
      %s260 = scalar_lea.vmem %s5, %s259
      %s261 = smul.u32 2, %s21
      %v263 = vld [vmem:[%s251] sm:$0xf]
      %v264 = vld [vmem:[%s251 + $0x4] sm:$0xf]
      %v265 = vld [vmem:[%s251 + $0x8] sm:$0x7]
      %v266 = vld [vmem:[%s1] sm:$0xf]
      %s267 = scalar_lea.vmem %s1, 4
      %v268 = vld [vmem:[%s267] sm:$0xf]
      %v272 = vunpack.c.l.b16 %v263
      %v273 = vunpack.c.l.b16 %v264
      %v274 = vunpack.c.l.b16 %v265
      %v275 = vpack.c.b16 %v273, %v272
      %v276 = vpack.c.b16 %v274, %v274
      %vm277 = vsmask.f32 7424
      %v279 = vshrl.u32 %v275, 16
      %v281 = vshll.u32 %v275, 16
      %v283 = vrot.slane %v281, 1
      %v284 = vor.u32 %v279, %v283
      %v286 = vshll.u32 %v276, 16
      %v288 = vrot.slane %v286, 1
      %v289 = vsel %vm277, %v284, %v288
      %v290 = vshrl.u32 %v276, 16
      %v292 = vor.u32 %v290, %v288
      %vm293 = vcmask 64512
      %v295 = vsel %vm293, %v289, 0
      %v298 = vsel %vm293, %v292, 0
      %vm300 = vcmask 1043456
      %v302 = vsel %vm300, %v268, 0
      %304 = vmatpush.bf16.msra.mxu0 0
      %305 = vmatpush.bf16.msra.mxu0 0
      %306 = vmatpush.bf16.msra.mxu0 0
      %307 = vmatpush.bf16.msra.mxu0 0
      %308 = vmatpush.bf16.msra.mxu0 0
      %309 = vmatpush.bf16.msra.mxu0 0
      %310 = vmatpush.bf16.msra.mxu0 0
      %311 = vmatpush.bf16.msra.mxu0 %v302
      %312 = vmatmul.bf16.gmra.mxu0 %v295
      %v313 = vpop.f32.mrf.mxu0
      %v314 = vadd.f32 0.0, %v313
      %v315 = vpop.f32.mrf.mxu0
      %v316 = vadd.f32 0.0, %v315
      %317 = vmatmul.bf16.gmra.mxu0 %v298
      %v318 = vpop.f32.mrf.mxu0
      %v319 = vadd.f32 0.0, %v318
      %v320 = vpop.f32.mrf.mxu0
      %321 = vdwg.mxu0
      %v322 = vsel %vm293, %v275, 0
      %v324 = vsel %vm293, %v276, 0
      %v327 = vsel %vm300, %v266, 0
      %329 = vmatpush.bf16.msra.mxu0 0
      %330 = vmatpush.bf16.msra.mxu0 0
      %331 = vmatpush.bf16.msra.mxu0 0
      %332 = vmatpush.bf16.msra.mxu0 0
      %333 = vmatpush.bf16.msra.mxu0 0
      %334 = vmatpush.bf16.msra.mxu0 0
      %335 = vmatpush.bf16.msra.mxu0 0
      %336 = vmatpush.bf16.msra.mxu0 %v327
      %337 = vmatmul.bf16.gmra.mxu0 %v322
      %v338 = vpop.f32.mrf.mxu0
      %v339 = vadd.f32 %v314, %v338
      %v340 = vpop.f32.mrf.mxu0
      %v341 = vadd.f32 %v316, %v340
      %342 = vmatmul.bf16.gmra.mxu0 %v324
      %v343 = vpop.f32.mrf.mxu0
      %v344 = vadd.f32 %v319, %v343
      %v345 = vpop.f32.mrf.mxu0
      %346 = vdwg.mxu0
      %s347 = scalar_lea.vmem %s1, 8
      %v348 = vld [vmem:[%s347] sm:$0xf]
      %vm349 = vcmask 1046528
      %v350 = vrot.slane %v275, 1
      %v351 = vrot.slane %v276, 1
      %v352 = vsel %vm349, %v350, %v351
      %v354 = vsel %vm293, %v352, 0
      %v357 = vsel %vm293, %v351, 0
      %v360 = vsel %vm300, %v348, 0
      %362 = vmatpush.bf16.msra.mxu0 0
      %363 = vmatpush.bf16.msra.mxu0 0
      %364 = vmatpush.bf16.msra.mxu0 0
      %365 = vmatpush.bf16.msra.mxu0 0
      %366 = vmatpush.bf16.msra.mxu0 0
      %367 = vmatpush.bf16.msra.mxu0 0
      %368 = vmatpush.bf16.msra.mxu0 0
      %369 = vmatpush.bf16.msra.mxu0 %v360
      %370 = vmatmul.bf16.gmra.mxu0 %v354
      %v371 = vpop.f32.mrf.mxu0
      %v372 = vadd.f32 0.0, %v371
      %v373 = vpop.f32.mrf.mxu0
      %v374 = vadd.f32 0.0, %v373
      %375 = vmatmul.bf16.gmra.mxu0 %v357
      %v376 = vpop.f32.mrf.mxu0
      %v377 = vadd.f32 0.0, %v376
      %v378 = vpop.f32.mrf.mxu0
      %379 = vdwg.mxu0
      %v380 = vadd.f32 %v339, %v372
      %v381 = vadd.f32 %v341, %v374
      %v382 = vadd.f32 %v344, %v377
      %v383 = vld [vmem:[%s2] sm:$0x1]
      %v385 = vperm.slane %v383, 0
      %v387 = vadd.f32 %v380, %v385
      %v388 = vadd.f32 %v381, %v385
      %v389 = vadd.f32 %v382, %v385
      %vm390 = vcmp.ge.f32.partialorder %v387, 0.0
      %vm391 = vcmp.ge.f32.partialorder %v388, 0.0
      %vm392 = vcmp.ge.f32.partialorder %v389, 0.0
      %v393 = vmul.f32 %v387, 0.01
      %v394 = vmul.f32 %v388, 0.01
      %v395 = vmul.f32 %v389, 0.01
      %v396 = vsel %vm390, %v387, %v393
      %v397 = vsel %vm391, %v388, %v394
      %v398 = vsel %vm392, %v389, %v395
      %s399 = smul.u32 %s21, 16
      %s400 = ssub.s32 %s399, 2
      %v401 = vlaneseq
      %v402 = vshrl.u32 %v401, 7
      %v403 = vadd.s32 %v402, 8
      %v404 = vadd.s32 %v402, 16
      %v405 = vstv %s400
      %v406 = vadd.s32 %v405, %v402
      %v407 = vadd.s32 %v405, %v403
      %v408 = vadd.s32 %v405, %v404
      %vm409 = vcmp.ge.s32.totalorder %v406, 0
      %vm410 = vcmp.ge.s32.totalorder %v407, 0
      %vm411 = vcmp.ge.s32.totalorder %v408, 0
      %vm412 = vcmp.lt.s32.totalorder %v406, 16
      %vm413 = vcmp.lt.s32.totalorder %v407, 16
      %vm414 = vcmp.lt.s32.totalorder %v408, 16
      %vm415 = vmand %vm409, %vm412
      %vm416 = vmand %vm410, %vm413
      %vm417 = vmand %vm411, %vm414
      %v418 = vsel %vm415, 1, 0
      %v419 = vsel %vm416, 1, 0
      %v420 = vsel %vm417, 1, 0
      %vm421 = vcmp.eq.s32.totalorder %v418, 1
      %vm422 = vcmp.eq.s32.totalorder %v419, 1
      %vm423 = vcmp.eq.s32.totalorder %v420, 1
      %v424 = vsel %vm421, %v396, 0.0
      %v425 = vsel %vm422, %v397, 0.0
      %v426 = vsel %vm423, %v398, 0.0
      %v427 = vpack.c.bf16 %v424, %v424
      %v428 = vpack.c.bf16 %v425, %v425
      %v429 = vpack.c.bf16 %v426, %v426
      %v430 = vld [vmem:[%s3] sm:$0xf]
      %s431 = scalar_lea.vmem %s3, 4
      %v432 = vld [vmem:[%s431] sm:$0xf]
      %v436 = vunpack.c.l.b16 %v427
      %v437 = vunpack.c.l.b16 %v428
      %v438 = vunpack.c.l.b16 %v429
      %v439 = vpack.c.b16 %v437, %v436
      %v440 = vpack.c.b16 %v438, %v438
      %v442 = vshrl.u32 %v439, 16
      %v444 = vshll.u32 %v439, 16
      %v446 = vrot.slane %v444, 1
      %v447 = vor.u32 %v442, %v446
      %v449 = vshll.u32 %v440, 16
      %v451 = vrot.slane %v449, 1
      %v452 = vsel %vm277, %v447, %v451
      %453 = vrot.lane.b32.xlu0 %v452, 124
      %v454 = vpop.permute.xlu0 %453
      %v456 = vsel %vm293, %v454, 0
      %v459 = vsel %vm300, %v432, 0
      %461 = vmatpush.bf16.msra.mxu0 0
      %462 = vmatpush.bf16.msra.mxu0 0
      %463 = vmatpush.bf16.msra.mxu0 0
      %464 = vmatpush.bf16.msra.mxu0 0
      %465 = vmatpush.bf16.msra.mxu0 0
      %466 = vmatpush.bf16.msra.mxu0 0
      %467 = vmatpush.bf16.msra.mxu0 0
      %468 = vmatpush.bf16.msra.mxu0 %v459
      %469 = vmatmul.bf16.gmra.mxu0 %v456
      %v470 = vpop.f32.mrf.mxu0
      %v471 = vadd.f32 0.0, %v470
      %v472 = vpop.f32.mrf.mxu0
      %v473 = vadd.f32 0.0, %v472
      %474 = vdwg.mxu0
      %475 = vrot.lane.b32.xlu0 %v439, 124
      %v476 = vpop.permute.xlu0 %475
      %v478 = vsel %vm293, %v476, 0
      %v481 = vsel %vm300, %v430, 0
      %483 = vmatpush.bf16.msra.mxu0 0
      %484 = vmatpush.bf16.msra.mxu0 0
      %485 = vmatpush.bf16.msra.mxu0 0
      %486 = vmatpush.bf16.msra.mxu0 0
      %487 = vmatpush.bf16.msra.mxu0 0
      %488 = vmatpush.bf16.msra.mxu0 0
      %489 = vmatpush.bf16.msra.mxu0 0
      %490 = vmatpush.bf16.msra.mxu0 %v481
      %491 = vmatmul.bf16.gmra.mxu0 %v478
      %v492 = vpop.f32.mrf.mxu0
      %v493 = vadd.f32 %v471, %v492
      %v494 = vpop.f32.mrf.mxu0
      %v495 = vadd.f32 %v473, %v494
      %496 = vdwg.mxu0
      %s497 = scalar_lea.vmem %s3, 8
      %v498 = vld [vmem:[%s497] sm:$0xf]
      %v499 = vrot.slane %v439, 1
      %v500 = vrot.slane %v440, 1
      %v501 = vsel %vm349, %v499, %v500
      %502 = vrot.lane.b32.xlu0 %v501, 124
      %v503 = vpop.permute.xlu0 %502
      %v505 = vsel %vm293, %v503, 0
      %v508 = vsel %vm300, %v498, 0
      %510 = vmatpush.bf16.msra.mxu0 0
      %511 = vmatpush.bf16.msra.mxu0 0
      %512 = vmatpush.bf16.msra.mxu0 0
      %513 = vmatpush.bf16.msra.mxu0 0
      %514 = vmatpush.bf16.msra.mxu0 0
      %515 = vmatpush.bf16.msra.mxu0 0
      %516 = vmatpush.bf16.msra.mxu0 0
      %517 = vmatpush.bf16.msra.mxu0 %v508
      %518 = vmatmul.bf16.gmra.mxu0 %v505
      %v519 = vpop.f32.mrf.mxu0
      %v520 = vadd.f32 0.0, %v519
      %v521 = vpop.f32.mrf.mxu0
      %v522 = vadd.f32 0.0, %v521
      %523 = vdwg.mxu0
      %v524 = vadd.f32 %v493, %v520
      %v525 = vadd.f32 %v495, %v522
      %s526 = scalar_lea.vmem %s3, 12
      %v527 = vld [vmem:[%s526] sm:$0xf]
      %vm528 = vsmask.f32 6400
      %v529 = vrot.slane %v442, 1
      %v530 = vrot.slane %v444, 2
      %v531 = vor.u32 %v529, %v530
      %v532 = vshrl.u32 %v440, 16
      %v534 = vrot.slane %v532, 1
      %v535 = vrot.slane %v449, 2
      %v536 = vor.u32 %v534, %v535
      %v537 = vsel %vm528, %v531, %v536
      %538 = vrot.lane.b32.xlu0 %v537, 124
      %v539 = vpop.permute.xlu0 %538
      %v541 = vsel %vm293, %v539, 0
      %v544 = vsel %vm300, %v527, 0
      %546 = vmatpush.bf16.msra.mxu0 0
      %547 = vmatpush.bf16.msra.mxu0 0
      %548 = vmatpush.bf16.msra.mxu0 0
      %549 = vmatpush.bf16.msra.mxu0 0
      %550 = vmatpush.bf16.msra.mxu0 0
      %551 = vmatpush.bf16.msra.mxu0 0
      %552 = vmatpush.bf16.msra.mxu0 0
      %553 = vmatpush.bf16.msra.mxu0 %v544
      %554 = vmatmul.bf16.gmra.mxu0 %v541
      %v555 = vpop.f32.mrf.mxu0
      %v556 = vadd.f32 0.0, %v555
      %v557 = vpop.f32.mrf.mxu0
      %v558 = vadd.f32 0.0, %v557
      %559 = vdwg.mxu0
      %v560 = vadd.f32 %v524, %v556
      %v561 = vadd.f32 %v525, %v558
      %s562 = scalar_lea.vmem %s3, 16
      %v563 = vld [vmem:[%s562] sm:$0xf]
      %vm564 = vcmask 1045504
      %v565 = vrot.slane %v439, 2
      %v566 = vrot.slane %v440, 2
      %v567 = vsel %vm564, %v565, %v566
      %568 = vrot.lane.b32.xlu0 %v567, 124
      %v569 = vpop.permute.xlu0 %568
      %v571 = vsel %vm293, %v569, 0
      %v574 = vsel %vm300, %v563, 0
      %576 = vmatpush.bf16.msra.mxu0 0
      %577 = vmatpush.bf16.msra.mxu0 0
      %578 = vmatpush.bf16.msra.mxu0 0
      %579 = vmatpush.bf16.msra.mxu0 0
      %580 = vmatpush.bf16.msra.mxu0 0
      %581 = vmatpush.bf16.msra.mxu0 0
      %582 = vmatpush.bf16.msra.mxu0 0
      %583 = vmatpush.bf16.msra.mxu0 %v574
      %584 = vmatmul.bf16.gmra.mxu0 %v571
      %v585 = vpop.f32.mrf.mxu0
      %v586 = vadd.f32 0.0, %v585
      %v587 = vpop.f32.mrf.mxu0
      %v588 = vadd.f32 0.0, %v587
      %589 = vdwg.mxu0
      %v590 = vadd.f32 %v560, %v586
      %v591 = vadd.f32 %v561, %v588
      %v592 = vld [vmem:[%s4] sm:$0x1]
      %v594 = vperm.slane %v592, 0
      %v596 = vadd.f32 %v590, %v594
      %v597 = vadd.f32 %v591, %v594
      %vm598 = vcmp.ge.f32.partialorder %v596, 0.0
      %vm599 = vcmp.ge.f32.partialorder %v597, 0.0
      %v600 = vmul.f32 %v596, 0.01
      %v601 = vmul.f32 %v597, 0.01
      %v602 = vsel %vm598, %v596, %v600
      %v603 = vsel %vm599, %v597, %v601
      %vm606 = vcmask 1041408
      %v607 = vrot.slane %v602, 6
      %v608 = vrot.slane %v603, 6
      %v609 = vsel %vm606, %v607, %v608
      %610 = vrot.lane.b32.xlu0 %v607, 4
      %v611 = vpop.permute.xlu0 %610
      %612 = vrot.lane.b32.xlu0 %v609, 4
      %v613 = vpop.permute.xlu0 %612
      %614 = vrot.lane.b32.xlu0 %v608, 4
      %v615 = vpop.permute.xlu0 %614
      %vm619 = vcmask 31744
      %v620 = vsel %vm619, %v396, %v611
      %v621 = vsel %vm619, %v397, %v613
      %v622 = vsel %vm619, %v398, %v615
      %vm623 = vcmask 97280
      %v624 = vsel %vm623, %v620, %v396
      %v625 = vsel %vm623, %v621, %v397
      %v626 = vsel %vm623, %v622, %v398
      %vm627 = vcmask 130050
      %628 = vst.msk [vmem:[%s260 - $0x2] sm:$0xfc] %vm627, %v624
      %vm629 = vcmask 130048
      %630 = vst.msk [vmem:[%s260 + $0x6] sm:$0xff] %vm629, %v625
      %vm631 = vcmask 123904
      %632 = vst.msk [vmem:[%s260 + $0xe] sm:$0x3] %vm631, %v626
      %s633 = smul.u32 2, %s21
      %p634 = scmp.lt.s32.totalorder %s20, 1
      %s635 = scalar_select %p634, %s20, 1
      %p636 = scmp.lt.s32.totalorder %s633, 1
      %s637 = scalar_select %p636, %s633, 1
      %s638 = smul.addr %s635, 2
      %s639 = sadd.s32 %s637, %s638
      %s640 = smul.addr %s639, 8
      %s641 = scalar_lea.vmem %s5, %s640
      // Predicated region
      $region41: #{inception_forward.1} parent=39 // pred_check
        %p642 = pneg %p160
      $region42: #{inception_forward.1} parent=39 // pred_check_branch
        %644 = sbr.rel (%p642) target = $region44
      $region43: #{inception_forward.1} parent=39 // pred_region
        %s645 = smul.u32 2, %s21
      $region44: #{inception_forward.1} parent=39 // pred_fallthru
        _
    $region40: #{inception_forward.1} parent=5 // pred_fallthru
      _
    %p646 = scmp.le.s32.totalorder 2, %s11
    // Predicated region
    $region45: #{inception_forward.1} parent=5 // pred_check
      %p647 = pneg %p646
    $region46: #{inception_forward.1} parent=5 // pred_check_branch
      %649 = sbr.rel (%p647) target = $region48
    $region47: #{inception_forward.1} parent=5 // pred_region
      %s650 = ssub.s32 %s11, 2
      // Predicated region
      $region49: #{inception_forward.1} parent=47 // pred_check
        %p651 = pneg %p166
      $region50: #{inception_forward.1} parent=47 // pred_check_branch
        %653 = sbr.rel (%p651) target = $region52
      $region51: #{inception_forward.1} parent=47 // pred_region
        %s654 = smul.u32 2, %s23
        %p655 = scmp.lt.s32.totalorder %s22, 1
        %s656 = scalar_select %p655, %s22, 1
        %p657 = scmp.lt.s32.totalorder %s654, 1
        %s658 = scalar_select %p657, %s654, 1
        %s659 = smul.addr %s656, 2
        %s660 = sadd.s32 %s658, %s659
        %s661 = smul.addr %s660, 8
        %s662 = scalar_lea.vmem %s5, %s661
      $region52: #{inception_forward.1} parent=47 // pred_fallthru
        _
    $region48: #{inception_forward.1} parent=5 // pred_fallthru
      _
  $region6: #{inception_forward.1} parent=0 // loop_footer
    %s15 = sadd.s32 1, %s11
  $region7: #{inception_forward.1} parent=0 // loop_footer_branch
    %10 = sbr.rel target = $region3
  $region8: #{inception_forward.1} parent=0 // loop_exit
    _

</llo_original>
